<compile_context>
chip_gen: v6e
topology: v6e:2x2x1
jax: 0.10.0
libtpu: 0.0.40
codegen_flags: <defaults>
</compile_context>

<pallas_src>
import functools

import jax
import jax.numpy as jnp
from jax import lax
from jax.experimental import pallas as pl
from jax.experimental.pallas import tpu as pltpu


def _round_up(n: int, m: int) -> int:
    return (n + m - 1) // m * m


def rnn_kernel(x_ref, h0_ref, w_pack_ref, head_pack_ref, out_ref, xproj_ref,
               *, seq_len, batch_group, input_size, hidden_size):
    """One batch-group (BG sequences) of the full RNN forward.

    x_ref        : (T*BG, I_p)   rows [t*BG, (t+1)*BG) are timestep t
    h0_ref       : (BG, H_p)
    w_pack_ref   : (I_p + H_p + 1, H_p)   [W_ih^T ; W_hh^T ; b_ih+b_hh]
    head_pack_ref: (H_p + 1, O_p)         [W_h2o^T ; b_h2o]
    out_ref      : (BG, O_p)
    xproj_ref    : VMEM scratch (T*BG, H_p)
    """
    I, H, BG, T = input_size, hidden_size, batch_group, seq_len

    wih_t = w_pack_ref[0:I, :]                       # (I_p, H_p)
    whh_t = w_pack_ref[I:I + H, :]                   # (H_p, H_p), loaded once
    bias = w_pack_ref[I + H:I + H + 1, :]            # (1, H_p) folded b_ih+b_hh

    # Hoisted input projection for all timesteps & the whole sublane batch:
    # one (T*BG, I) @ (I, H) MXU matmul, result parked in VMEM scratch so the
    # per-step loads stay off the serial dependence chain.
    xproj_ref[...] = (jnp.dot(x_ref[...], wih_t,
                              preferred_element_type=jnp.float32) + bias)

    h = h0_ref[...]                                  # (BG, H_p), vreg-resident

    # Serial recurrence, fully unrolled (T is static and small).  Only the
    # h @ W_hh^T matmul, one add and tanh sit on the dependence chain.
    for t in range(T):
        xp = xproj_ref[t * BG:(t + 1) * BG, :]       # (BG, H_p) off-chain vld
        h = jnp.tanh(jnp.dot(h, whh_t, preferred_element_type=jnp.float32)
                     + xp)

    # Linear head on the final hidden state (lane-dense padded output).
    who_t = head_pack_ref[0:H, :]                    # (H_p, O_p)
    bho = head_pack_ref[H:H + 1, :]                  # (1, O_p)
    out_ref[...] = (jnp.dot(h, who_t, preferred_element_type=jnp.float32)
                    + bho).astype(out_ref.dtype)


def rnn_forward_batched(x_b, h0_b, w_ih, w_hh, b_ih, b_hh, w_h2o, b_h2o):
    """B independent sequences at once.

    x_b: (B, T, I), h0_b: (B, H); weights in PyTorch shape conventions.
    Returns (B, O) float32.
    """
    B, T, I = x_b.shape
    H = w_hh.shape[0]
    O = w_h2o.shape[0]

    BG = 8                              # f32 sublane group (one vreg row-tile)
    I_p = _round_up(I, 8)
    H_p = _round_up(H, 8)
    O_p = _round_up(O, 128)             # lane-dense output -> unmasked vst
    B_p = _round_up(B, BG)
    G = B_p // BG                       # batch groups == grid size

    # ---- packing / padding glue (cheap XLA ops outside the kernel) --------
    # x laid out so block g, timestep t occupies rows [t*BG, (t+1)*BG).
    x_pad = jnp.zeros((B_p, T, I_p), jnp.float32).at[:B, :, :I].set(
        x_b.astype(jnp.float32))
    x_pack = (x_pad.reshape(G, BG, T, I_p)
                   .transpose(0, 2, 1, 3)            # (G, T, BG, I_p)
                   .reshape(G * T * BG, I_p))
    h0_pack = jnp.zeros((B_p, H_p), jnp.float32).at[:B, :H].set(
        h0_b.astype(jnp.float32))

    # Coalesced RNN weights: [W_ih^T ; W_hh^T ; folded bias] in one buffer.
    w_pack = jnp.zeros((I_p + H_p + 1, H_p), jnp.float32)
    w_pack = w_pack.at[:I, :H].set(w_ih.T)
    w_pack = w_pack.at[I_p:I_p + H, :H].set(w_hh.T)
    w_pack = w_pack.at[I_p + H_p, :H].set(b_ih + b_hh)

    # Coalesced head: [W_h2o^T ; b_h2o], lane-padded to O_p.
    head_pack = jnp.zeros((H_p + 1, O_p), jnp.float32)
    head_pack = head_pack.at[:H, :O].set(w_h2o.T)
    head_pack = head_pack.at[H_p, :O].set(b_h2o)

    kernel = functools.partial(rnn_kernel, seq_len=T, batch_group=BG,
                               input_size=I_p, hidden_size=H_p)

    out = pl.pallas_call(
        kernel,
        out_shape=jax.ShapeDtypeStruct((B_p, O_p), jnp.float32),
        grid=(G,),
        in_specs=[
            pl.BlockSpec((T * BG, I_p), lambda g: (g, 0)),
            pl.BlockSpec((BG, H_p), lambda g: (g, 0)),
            pl.BlockSpec((I_p + H_p + 1, H_p), lambda g: (0, 0)),
            pl.BlockSpec((H_p + 1, O_p), lambda g: (0, 0)),
        ],
        out_specs=pl.BlockSpec((BG, O_p), lambda g: (g, 0)),
        scratch_shapes=[pltpu.VMEM((T * BG, H_p), jnp.float32)],
        compiler_params=pltpu.CompilerParams(
            dimension_semantics=("parallel",)),
    )(x_pack, h0_pack, w_pack, head_pack)

    return out[:B, :O]


rnn_forward_batched_jit = jax.jit(rnn_forward_batched)


@jax.jit
def rnn_model_forward(x, h0, w_ih, w_hh, b_ih, b_hh, w_h2o, b_h2o):
    """Matches RNNModel.forward: x (T, 1, I), h0 (1, 1, H) -> (1, O)."""
    T, batch, I = x.shape
    assert batch == 1
    H = w_hh.shape[0]
    x_b = x.transpose(1, 0, 2)          # (1, T, I)
    h0_b = h0.reshape(1, H)
    return rnn_forward_batched(x_b, h0_b, w_ih, w_hh, b_ih, b_hh, w_h2o, b_h2o)


# ---------------------------- pure-JAX references ---------------------------

def rnn_model_reference(x, h0, w_ih, w_hh, b_ih, b_hh, w_h2o, b_h2o):
    """Matches torch.nn.RNN(tanh) + Linear for x (T, 1, I)."""
    def step(h, x_t):
        h_new = jnp.tanh(x_t @ w_ih.T + b_ih + h @ w_hh.T + b_hh)
        return h_new, None
    h_final, _ = lax.scan(step, h0.reshape(1, -1), x[:, 0, :])
    return h_final @ w_h2o.T + b_h2o


def rnn_model_reference_batched(x_b, h0_b, w_ih, w_hh, b_ih, b_hh, w_h2o, b_h2o):
    def one(x_seq, h0):
        def step(h, x_t):
            return jnp.tanh(x_t @ w_ih.T + b_ih + h @ w_hh.T + b_hh), None
        h_fin, _ = lax.scan(step, h0, x_seq)
        return h_fin @ w_h2o.T + b_h2o
    return jax.vmap(one)(x_b, h0_b)


if __name__ == "__main__":
    seq_len = 8
    input_size = 16
    hidden_size = 32
    output_size = 8

    key = jax.random.PRNGKey(0)
    ks = jax.random.split(key, 9)
    bound = 1.0 / jnp.sqrt(hidden_size)

    # Deterministic synthetic parameters (PyTorch shape conventions).
    w_ih = jax.random.uniform(ks[0], (hidden_size, input_size), jnp.float32, -bound, bound)
    w_hh = jax.random.uniform(ks[1], (hidden_size, hidden_size), jnp.float32, -bound, bound)
    b_ih = jax.random.uniform(ks[2], (hidden_size,), jnp.float32, -bound, bound)
    b_hh = jax.random.uniform(ks[3], (hidden_size,), jnp.float32, -bound, bound)
    w_h2o = jax.random.uniform(ks[4], (output_size, hidden_size), jnp.float32, -bound, bound)
    b_h2o = jax.random.uniform(ks[5], (output_size,), jnp.float32, -bound, bound)

    # --- module-semantics path: one sequence, batch = 1 (like the nn.Module) ---
    x = jax.random.normal(ks[6], (seq_len, 1, input_size), jnp.float32)
    h0 = jnp.zeros((1, 1, hidden_size), jnp.float32)   # init_hidden()

    out = rnn_model_forward(x, h0, w_ih, w_hh, b_ih, b_hh, w_h2o, b_h2o)
    out = jax.block_until_ready(out)
    ref = rnn_model_reference(x, h0, w_ih, w_hh, b_ih, b_hh, w_h2o, b_h2o)
    assert out.shape == (1, output_size)
    assert jnp.allclose(out, ref, atol=1e-5, rtol=1e-5), (out, ref)

    # --- sublane-batched throughput path: 8 independent sequences per call ---
    B = 8
    x_b = jax.random.normal(ks[7], (B, seq_len, input_size), jnp.float32)
    h0_b = jnp.zeros((B, hidden_size), jnp.float32)

    out_b = rnn_forward_batched_jit(x_b, h0_b, w_ih, w_hh, b_ih, b_hh, w_h2o, b_h2o)
    out_b = jax.block_until_ready(out_b)
    ref_b = rnn_model_reference_batched(x_b, h0_b, w_ih, w_hh, b_ih, b_hh, w_h2o, b_h2o)
    assert out_b.shape == (B, output_size)
    assert jnp.allclose(out_b, ref_b, atol=1e-5, rtol=1e-5), (out_b, ref_b)

    print("KERNEL_OK")
</pallas_src>

<mosaic_0001>
module attributes {stable_mosaic.version = 11 : i64} {
  func.func @rnn_kernel(%arg0: i32, %arg1: memref<64x16xf32, #tpu.memory_space<vmem>>, %arg2: memref<8x32xf32, #tpu.memory_space<vmem>>, %arg3: memref<49x32xf32, #tpu.memory_space<vmem>>, %arg4: memref<33x128xf32, #tpu.memory_space<vmem>>, %arg5: memref<8x128xf32, #tpu.memory_space<vmem>>, %arg6: memref<64x32xf32, #tpu.memory_space<vmem>>) attributes {dimension_semantics = [#tpu.dimension_semantics<parallel>], iteration_bounds = array<i64: 1>, scalar_prefetch = 0 : i64, scratch_operands = 1 : i64, tpu.core_type = #tpu.core_type<tc>, window_params = [{transform_indices = @transform_0, window_bounds = array<i64: 64, 16>}, {transform_indices = @transform_1, window_bounds = array<i64: 8, 32>}, {pipeline_mode = #tpu.pipeline_mode<synchronous>, transform_indices = @transform_2, window_bounds = array<i64: 49, 32>}, {pipeline_mode = #tpu.pipeline_mode<synchronous>, transform_indices = @transform_3, window_bounds = array<i64: 33, 128>}, {transform_indices = @transform_4, window_bounds = array<i64: 8, 128>}]} {
    %c0 = arith.constant 0 : index
    %c0_0 = arith.constant 0 : index
    %0 = vector.load %arg3[%c0, %c0_0] : memref<49x32xf32, #tpu.memory_space<vmem>>, vector<16x32xf32>
    %c16 = arith.constant 16 : index
    %c0_1 = arith.constant 0 : index
    %1 = vector.load %arg3[%c16, %c0_1] : memref<49x32xf32, #tpu.memory_space<vmem>>, vector<32x32xf32>
    %c48 = arith.constant 48 : index
    %c0_2 = arith.constant 0 : index
    %2 = vector.load %arg3[%c48, %c0_2] : memref<49x32xf32, #tpu.memory_space<vmem>>, vector<1x32xf32>
    %c0_3 = arith.constant 0 : index
    %c0_4 = arith.constant 0 : index
    %3 = vector.load %arg1[%c0_3, %c0_4] : memref<64x16xf32, #tpu.memory_space<vmem>>, vector<64x16xf32>
    %cst = arith.constant dense<0.000000e+00> : vector<64x32xf32>
    %4 = tpu.matmul %3, %0, %cst {dimension_numbers = #tpu.dot_dimension_numbers<[1], [0], [0], [1], [0, 0, 1, 1], [], []>} : vector<64x16xf32>, vector<16x32xf32>, vector<64x32xf32> -> vector<64x32xf32>
    %5 = vector.broadcast %2 : vector<1x32xf32> to vector<64x32xf32>
    %6 = arith.addf %4, %5 : vector<64x32xf32>
    %c0_5 = arith.constant 0 : index
    %c0_6 = arith.constant 0 : index
    %7 = vector.load %arg6[%c0_5, %c0_6] : memref<64x32xf32, #tpu.memory_space<vmem>>, vector<64x32xf32>
    tpu.vector_store %arg6[%c0_5, %c0_6], %6 {strides = array<i32>} : memref<64x32xf32, #tpu.memory_space<vmem>>, vector<64x32xf32>,
    %c0_7 = arith.constant 0 : index
    %c0_8 = arith.constant 0 : index
    %8 = vector.load %arg2[%c0_7, %c0_8] : memref<8x32xf32, #tpu.memory_space<vmem>>, vector<8x32xf32>
    %c0_9 = arith.constant 0 : index
    %c0_10 = arith.constant 0 : index
    %9 = vector.load %arg6[%c0_9, %c0_10] : memref<64x32xf32, #tpu.memory_space<vmem>>, vector<8x32xf32>
    %cst_11 = arith.constant dense<0.000000e+00> : vector<8x32xf32>
    %10 = tpu.matmul %8, %1, %cst_11 {dimension_numbers = #tpu.dot_dimension_numbers<[1], [0], [0], [1], [0, 0, 1, 1], [], []>} : vector<8x32xf32>, vector<32x32xf32>, vector<8x32xf32> -> vector<8x32xf32>
    %11 = arith.addf %10, %9 : vector<8x32xf32>
    %12 = math.tanh %11 : vector<8x32xf32>
    %c8 = arith.constant 8 : index
    %c0_12 = arith.constant 0 : index
    %13 = vector.load %arg6[%c8, %c0_12] : memref<64x32xf32, #tpu.memory_space<vmem>>, vector<8x32xf32>
    %cst_13 = arith.constant dense<0.000000e+00> : vector<8x32xf32>
    %14 = tpu.matmul %12, %1, %cst_13 {dimension_numbers = #tpu.dot_dimension_numbers<[1], [0], [0], [1], [0, 0, 1, 1], [], []>} : vector<8x32xf32>, vector<32x32xf32>, vector<8x32xf32> -> vector<8x32xf32>
    %15 = arith.addf %14, %13 : vector<8x32xf32>
    %16 = math.tanh %15 : vector<8x32xf32>
    %c16_14 = arith.constant 16 : index
    %c0_15 = arith.constant 0 : index
    %17 = vector.load %arg6[%c16_14, %c0_15] : memref<64x32xf32, #tpu.memory_space<vmem>>, vector<8x32xf32>
    %cst_16 = arith.constant dense<0.000000e+00> : vector<8x32xf32>
    %18 = tpu.matmul %16, %1, %cst_16 {dimension_numbers = #tpu.dot_dimension_numbers<[1], [0], [0], [1], [0, 0, 1, 1], [], []>} : vector<8x32xf32>, vector<32x32xf32>, vector<8x32xf32> -> vector<8x32xf32>
    %19 = arith.addf %18, %17 : vector<8x32xf32>
    %20 = math.tanh %19 : vector<8x32xf32>
    %c24 = arith.constant 24 : index
    %c0_17 = arith.constant 0 : index
    %21 = vector.load %arg6[%c24, %c0_17] : memref<64x32xf32, #tpu.memory_space<vmem>>, vector<8x32xf32>
    %cst_18 = arith.constant dense<0.000000e+00> : vector<8x32xf32>
    %22 = tpu.matmul %20, %1, %cst_18 {dimension_numbers = #tpu.dot_dimension_numbers<[1], [0], [0], [1], [0, 0, 1, 1], [], []>} : vector<8x32xf32>, vector<32x32xf32>, vector<8x32xf32> -> vector<8x32xf32>
    %23 = arith.addf %22, %21 : vector<8x32xf32>
    %24 = math.tanh %23 : vector<8x32xf32>
    %c32 = arith.constant 32 : index
    %c0_19 = arith.constant 0 : index
    %25 = vector.load %arg6[%c32, %c0_19] : memref<64x32xf32, #tpu.memory_space<vmem>>, vector<8x32xf32>
    %cst_20 = arith.constant dense<0.000000e+00> : vector<8x32xf32>
    %26 = tpu.matmul %24, %1, %cst_20 {dimension_numbers = #tpu.dot_dimension_numbers<[1], [0], [0], [1], [0, 0, 1, 1], [], []>} : vector<8x32xf32>, vector<32x32xf32>, vector<8x32xf32> -> vector<8x32xf32>
    %27 = arith.addf %26, %25 : vector<8x32xf32>
    %28 = math.tanh %27 : vector<8x32xf32>
    %c40 = arith.constant 40 : index
    %c0_21 = arith.constant 0 : index
    %29 = vector.load %arg6[%c40, %c0_21] : memref<64x32xf32, #tpu.memory_space<vmem>>, vector<8x32xf32>
    %cst_22 = arith.constant dense<0.000000e+00> : vector<8x32xf32>
    %30 = tpu.matmul %28, %1, %cst_22 {dimension_numbers = #tpu.dot_dimension_numbers<[1], [0], [0], [1], [0, 0, 1, 1], [], []>} : vector<8x32xf32>, vector<32x32xf32>, vector<8x32xf32> -> vector<8x32xf32>
    %31 = arith.addf %30, %29 : vector<8x32xf32>
    %32 = math.tanh %31 : vector<8x32xf32>
    %c48_23 = arith.constant 48 : index
    %c0_24 = arith.constant 0 : index
    %33 = vector.load %arg6[%c48_23, %c0_24] : memref<64x32xf32, #tpu.memory_space<vmem>>, vector<8x32xf32>
    %cst_25 = arith.constant dense<0.000000e+00> : vector<8x32xf32>
    %34 = tpu.matmul %32, %1, %cst_25 {dimension_numbers = #tpu.dot_dimension_numbers<[1], [0], [0], [1], [0, 0, 1, 1], [], []>} : vector<8x32xf32>, vector<32x32xf32>, vector<8x32xf32> -> vector<8x32xf32>
    %35 = arith.addf %34, %33 : vector<8x32xf32>
    %36 = math.tanh %35 : vector<8x32xf32>
    %c56 = arith.constant 56 : index
    %c0_26 = arith.constant 0 : index
    %37 = vector.load %arg6[%c56, %c0_26] : memref<64x32xf32, #tpu.memory_space<vmem>>, vector<8x32xf32>
    %cst_27 = arith.constant dense<0.000000e+00> : vector<8x32xf32>
    %38 = tpu.matmul %36, %1, %cst_27 {dimension_numbers = #tpu.dot_dimension_numbers<[1], [0], [0], [1], [0, 0, 1, 1], [], []>} : vector<8x32xf32>, vector<32x32xf32>, vector<8x32xf32> -> vector<8x32xf32>
    %39 = arith.addf %38, %37 : vector<8x32xf32>
    %40 = math.tanh %39 : vector<8x32xf32>
    %c0_28 = arith.constant 0 : index
    %c0_29 = arith.constant 0 : index
    %41 = vector.load %arg4[%c0_28, %c0_29] : memref<33x128xf32, #tpu.memory_space<vmem>>, vector<32x128xf32>
    %c32_30 = arith.constant 32 : index
    %c0_31 = arith.constant 0 : index
    %42 = vector.load %arg4[%c32_30, %c0_31] : memref<33x128xf32, #tpu.memory_space<vmem>>, vector<1x128xf32>
    %cst_32 = arith.constant dense<0.000000e+00> : vector<8x128xf32>
    %43 = tpu.matmul %40, %41, %cst_32 {dimension_numbers = #tpu.dot_dimension_numbers<[1], [0], [0], [1], [0, 0, 1, 1], [], []>} : vector<8x32xf32>, vector<32x128xf32>, vector<8x128xf32> -> vector<8x128xf32>
    %44 = vector.broadcast %42 : vector<1x128xf32> to vector<8x128xf32>
    %45 = arith.addf %43, %44 : vector<8x128xf32>
    %c0_33 = arith.constant 0 : index
    %c0_34 = arith.constant 0 : index
    %46 = vector.load %arg5[%c0_33, %c0_34] : memref<8x128xf32, #tpu.memory_space<vmem>>, vector<8x128xf32>
    tpu.vector_store %arg5[%c0_33, %c0_34], %45 {strides = array<i32>} : memref<8x128xf32, #tpu.memory_space<vmem>>, vector<8x128xf32>,
    return
  }
  func.func @transform_0(%arg0: i32) -> (i32, i32) {
    %c0_i32 = arith.constant 0 : i32
    %c0_i32_0 = arith.constant 0 : i32
    return %arg0, %c0_i32 : i32, i32
  }
  func.func @transform_1(%arg0: i32) -> (i32, i32) {
    %c0_i32 = arith.constant 0 : i32
    %c0_i32_0 = arith.constant 0 : i32
    return %arg0, %c0_i32 : i32, i32
  }
  func.func @transform_2(%arg0: i32) -> (i32, i32) {
    %c0_i32 = arith.constant 0 : i32
    %c0_i32_0 = arith.constant 0 : i32
    %c0_i32_1 = arith.constant 0 : i32
    return %c0_i32, %c0_i32_0 : i32, i32
  }
  func.func @transform_3(%arg0: i32) -> (i32, i32) {
    %c0_i32 = arith.constant 0 : i32
    %c0_i32_0 = arith.constant 0 : i32
    %c0_i32_1 = arith.constant 0 : i32
    return %c0_i32, %c0_i32_0 : i32, i32
  }
  func.func @transform_4(%arg0: i32) -> (i32, i32) {
    %c0_i32 = arith.constant 0 : i32
    %c0_i32_0 = arith.constant 0 : i32
    return %arg0, %c0_i32 : i32, i32
  }
}

</mosaic_0001>

<llo_original>
// kernel: rnn_model_forward.1
$region0: #{rnn_model_forward.1}
  #allocation0 [shape = 'u32[]', space=smem, size = 0x4, offset = 0x4, fixed_abs, tag = 'smem constant byte address 0x4 - core index']
  #allocation1 [shape = 'u32[144,128]{1,0:T(1,128)}', space=vmem, size = 0x12000, scoped, tag = 'internal scratch']
  #allocation2 [shape = 'f32[64,32]{1,0:T(8,128)}', space=vmem, size = 0x8000, scoped, tag = 'scratch operand']
  %s0 = inlined_call_operand.vmem [shape: f32[64,16], index: 0, kind: input, shape index: {}]
  %s1 = inlined_call_operand.vmem [shape: f32[8,32], index: 1, kind: input, shape index: {}]
  %s2 = inlined_call_operand.vmem [shape: f32[49,32], index: 2, kind: input, shape index: {}]
  %s3 = inlined_call_operand.vmem [shape: f32[33,128], index: 3, kind: input, shape index: {}]
  %s4 = inlined_call_operand.vmem [shape: f32[8,128], index: 4, kind: output, shape index: {}]
  %s5 = sld [smem:[#allocation0]]
  $region26: #{rnn_model_forward.1} parent=0
    _
  %s7 = ssub.s32 1, %s5
  %s8 = scalar_select 0, %s7, %s5
  // Predicated region
  $region2: #{rnn_model_forward.1} parent=0 // pred_check
    _
  $region3: #{rnn_model_forward.1} parent=0 // pred_check_branch
    %10 = sbr.rel (0) target = $region5
  $region4: #{rnn_model_forward.1} parent=0 // pred_region
    _
  $region5: #{rnn_model_forward.1} parent=0 // pred_fallthru
    _
  // Predicated region
  $region6: #{rnn_model_forward.1} parent=0 // pred_check
    _
  $region7: #{rnn_model_forward.1} parent=0 // pred_check_branch
    %12 = sbr.rel (0) target = $region9
  $region8: #{rnn_model_forward.1} parent=0 // pred_region
    _
  $region9: #{rnn_model_forward.1} parent=0 // pred_fallthru
    _
  // Predicated region
  $region10: #{rnn_model_forward.1} parent=0 // pred_check
    _
  $region11: #{rnn_model_forward.1} parent=0 // pred_check_branch
    %14 = sbr.rel (0) target = $region13
  $region12: #{rnn_model_forward.1} parent=0 // pred_region
    _
  $region13: #{rnn_model_forward.1} parent=0 // pred_fallthru
    _
  // Predicated region
  $region14: #{rnn_model_forward.1} parent=0 // pred_check
    _
  $region15: #{rnn_model_forward.1} parent=0 // pred_check_branch
    %16 = sbr.rel (0) target = $region17
  $region16: #{rnn_model_forward.1} parent=0 // pred_region
    _
  $region17: #{rnn_model_forward.1} parent=0 // pred_fallthru
    _
  %v17 = vld [vmem:[%s2] sm:$0xff]
  %v18 = vld [vmem:[%s2 + $0x8] sm:$0xff]
  %v19 = vld [vmem:[%s2 + $0x10] sm:$0xff]
  %v20 = vld [vmem:[%s2 + $0x18] sm:$0xff]
  %v21 = vld [vmem:[%s2 + $0x20] sm:$0xff]
  %v22 = vld [vmem:[%s2 + $0x28] sm:$0xff]
  %v23 = vld [vmem:[%s2 + $0x30] sm:$0x1]
  %v24 = vld [vmem:[%s0] sm:$0xff]
  %v25 = vld [vmem:[%s0 + $0x8] sm:$0xff]
  %v26 = vld [vmem:[%s0 + $0x10] sm:$0xff]
  %v27 = vld [vmem:[%s0 + $0x18] sm:$0xff]
  %v28 = vld [vmem:[%s0 + $0x20] sm:$0xff]
  %v29 = vld [vmem:[%s0 + $0x28] sm:$0xff]
  %v30 = vld [vmem:[%s0 + $0x30] sm:$0xff]
  %v31 = vld [vmem:[%s0 + $0x38] sm:$0xff]
  %v32 = vlaneseq
  %v33 = vshrl.u32 %v32, 7
  %v34 = vsub.s32 0, %v33
  %v35 = vrot.slane %v23, %v34
  %vm36 = vcmask 130048
  %v38 = vsel %vm36, %v24, 0
  %v41 = vsel %vm36, %v25, 0
  %v44 = vsel %vm36, %v26, 0
  %v47 = vsel %vm36, %v27, 0
  %v50 = vsel %vm36, %v28, 0
  %v53 = vsel %vm36, %v29, 0
  %v56 = vsel %vm36, %v30, 0
  %v59 = vsel %vm36, %v31, 0
  %61 = vmatprep.subr.mxu0 0.0
  %62 = vmatpush1.msra.mxu0 0.0
  %63 = vmatprep.subr.mxu0 0.0
  %64 = vmatpush1.msra.mxu0 0.0
  %65 = vmatprep.subr.mxu0 0.0
  %66 = vmatpush1.msra.mxu0 0.0
  %67 = vmatprep.subr.mxu0 0.0
  %68 = vmatpush1.msra.mxu0 0.0
  %69 = vmatprep.subr.mxu0 0.0
  %70 = vmatpush1.msra.mxu0 0.0
  %71 = vmatprep.subr.mxu0 0.0
  %72 = vmatpush1.msra.mxu0 0.0
  %73 = vmatprep.subr.mxu0 0.0
  %74 = vmatpush1.msra.mxu0 0.0
  %75 = vmatprep.subr.mxu0 0.0
  %76 = vmatpush1.msra.mxu0 0.0
  %77 = vmatprep.subr.mxu0 0.0
  %78 = vmatpush1.msra.mxu0 0.0
  %79 = vmatprep.subr.mxu0 0.0
  %80 = vmatpush1.msra.mxu0 0.0
  %81 = vmatprep.subr.mxu0 0.0
  %82 = vmatpush1.msra.mxu0 0.0
  %83 = vmatprep.subr.mxu0 0.0
  %84 = vmatpush1.msra.mxu0 0.0
  %85 = vmatprep.subr.mxu0 0.0
  %86 = vmatpush1.msra.mxu0 0.0
  %87 = vmatprep.subr.mxu0 0.0
  %88 = vmatpush1.msra.mxu0 0.0
  %89 = vmatprep.subr.mxu0 0.0
  %90 = vmatpush1.msra.mxu0 %v18
  %91 = vmatprep.subr.mxu0 0.0
  %92 = vmatpush1.msra.mxu0 %v17
  %93 = vmatprep.subr.mxu0 0.0
  %94 = vmatpush2.msra.mxu0 0.0
  %95 = vmatprep.subr.mxu0 0.0
  %96 = vmatpush2.msra.mxu0 0.0
  %97 = vmatprep.subr.mxu0 0.0
  %98 = vmatpush2.msra.mxu0 0.0
  %99 = vmatprep.subr.mxu0 0.0
  %100 = vmatpush2.msra.mxu0 0.0
  %101 = vmatprep.subr.mxu0 0.0
  %102 = vmatpush2.msra.mxu0 0.0
  %103 = vmatprep.subr.mxu0 0.0
  %104 = vmatpush2.msra.mxu0 0.0
  %105 = vmatprep.subr.mxu0 0.0
  %106 = vmatpush2.msra.mxu0 0.0
  %107 = vmatprep.subr.mxu0 0.0
  %108 = vmatpush2.msra.mxu0 0.0
  %109 = vmatprep.subr.mxu0 0.0
  %110 = vmatpush2.msra.mxu0 0.0
  %111 = vmatprep.subr.mxu0 0.0
  %112 = vmatpush2.msra.mxu0 0.0
  %113 = vmatprep.subr.mxu0 0.0
  %114 = vmatpush2.msra.mxu0 0.0
  %115 = vmatprep.subr.mxu0 0.0
  %116 = vmatpush2.msra.mxu0 0.0
  %117 = vmatprep.subr.mxu0 0.0
  %118 = vmatpush2.msra.mxu0 0.0
  %119 = vmatprep.subr.mxu0 0.0
  %120 = vmatpush2.msra.mxu0 0.0
  %121 = vmatprep.subr.mxu0 0.0
  %122 = vmatpush2.msra.mxu0 0.0
  %123 = vmatprep.subr.mxu0 0.0
  %124 = vmatpush2.msra.mxu0 0.0
  %125 = vmatprep.mubr.f32.mxu0 0.0
  %126 = vmatmul.mubr.f32.gmra.mxu0 %v38
  %v127 = vpop.f32.mrf.mxu0
  %v128 = vadd.f32 %v35, %v127
  %v129 = vpop.f32.mrf.mxu0
  %130 = vmatprep.mubr.f32.mxu0 0.0
  %131 = vmatmul.mubr.f32.gmra.mxu0 %v41
  %v132 = vpop.f32.mrf.mxu0
  %v133 = vadd.f32 %v35, %v132
  %v134 = vpop.f32.mrf.mxu0
  %135 = vmatprep.mubr.f32.mxu0 0.0
  %136 = vmatmul.mubr.f32.gmra.mxu0 %v44
  %v137 = vpop.f32.mrf.mxu0
  %v138 = vadd.f32 %v35, %v137
  %v139 = vpop.f32.mrf.mxu0
  %140 = vmatprep.mubr.f32.mxu0 0.0
  %141 = vmatmul.mubr.f32.gmra.mxu0 %v47
  %v142 = vpop.f32.mrf.mxu0
  %v143 = vadd.f32 %v35, %v142
  %v144 = vpop.f32.mrf.mxu0
  %145 = vmatprep.mubr.f32.mxu0 0.0
  %146 = vmatmul.mubr.f32.gmra.mxu0 %v50
  %v147 = vpop.f32.mrf.mxu0
  %v148 = vadd.f32 %v35, %v147
  %v149 = vpop.f32.mrf.mxu0
  %150 = vmatprep.mubr.f32.mxu0 0.0
  %151 = vmatmul.mubr.f32.gmra.mxu0 %v53
  %v152 = vpop.f32.mrf.mxu0
  %v153 = vadd.f32 %v35, %v152
  %v154 = vpop.f32.mrf.mxu0
  %155 = vmatprep.mubr.f32.mxu0 0.0
  %156 = vmatmul.mubr.f32.gmra.mxu0 %v56
  %v157 = vpop.f32.mrf.mxu0
  %v158 = vadd.f32 %v35, %v157
  %v159 = vpop.f32.mrf.mxu0
  %160 = vmatprep.mubr.f32.mxu0 0.0
  %161 = vmatmul.mubr.f32.gmra.mxu0 %v59
  %v162 = vpop.f32.mrf.mxu0
  %v163 = vadd.f32 %v35, %v162
  %v164 = vpop.f32.mrf.mxu0
  %165 = vdwg.mxu0
  %vm166 = vcmask 261120
  %167 = vst.msk [vmem:[#allocation2] sm:$0xff] %vm166, %v128
  %168 = vst.msk [vmem:[#allocation2 + $0x8] sm:$0xff] %vm166, %v133
  %169 = vst.msk [vmem:[#allocation2 + $0x10] sm:$0xff] %vm166, %v138
  %170 = vst.msk [vmem:[#allocation2 + $0x18] sm:$0xff] %vm166, %v143
  %171 = vst.msk [vmem:[#allocation2 + $0x20] sm:$0xff] %vm166, %v148
  %172 = vst.msk [vmem:[#allocation2 + $0x28] sm:$0xff] %vm166, %v153
  %173 = vst.msk [vmem:[#allocation2 + $0x30] sm:$0xff] %vm166, %v158
  %174 = vst.msk [vmem:[#allocation2 + $0x38] sm:$0xff] %vm166, %v163
  %v175 = vld [vmem:[%s1] sm:$0xff]
  %v176 = vld [vmem:[#allocation2] sm:$0xff]
  %v178 = vsel %vm166, %v175, 0
  %180 = vmatprep.subr.mxu0 0.0
  %181 = vmatpush1.msra.mxu0 0.0
  %182 = vmatprep.subr.mxu0 0.0
  %183 = vmatpush1.msra.mxu0 0.0
  %184 = vmatprep.subr.mxu0 0.0
  %185 = vmatpush1.msra.mxu0 0.0
  %186 = vmatprep.subr.mxu0 0.0
  %187 = vmatpush1.msra.mxu0 0.0
  %188 = vmatprep.subr.mxu0 0.0
  %189 = vmatpush1.msra.mxu0 0.0
  %190 = vmatprep.subr.mxu0 0.0
  %191 = vmatpush1.msra.mxu0 0.0
  %192 = vmatprep.subr.mxu0 0.0
  %193 = vmatpush1.msra.mxu0 0.0
  %194 = vmatprep.subr.mxu0 0.0
  %195 = vmatpush1.msra.mxu0 0.0
  %196 = vmatprep.subr.mxu0 0.0
  %197 = vmatpush1.msra.mxu0 0.0
  %198 = vmatprep.subr.mxu0 0.0
  %199 = vmatpush1.msra.mxu0 0.0
  %200 = vmatprep.subr.mxu0 0.0
  %201 = vmatpush1.msra.mxu0 0.0
  %202 = vmatprep.subr.mxu0 0.0
  %203 = vmatpush1.msra.mxu0 0.0
  %204 = vmatprep.subr.mxu0 0.0
  %205 = vmatpush1.msra.mxu0 %v22
  %206 = vmatprep.subr.mxu0 0.0
  %207 = vmatpush1.msra.mxu0 %v21
  %208 = vmatprep.subr.mxu0 0.0
  %209 = vmatpush1.msra.mxu0 %v20
  %210 = vmatprep.subr.mxu0 0.0
  %211 = vmatpush1.msra.mxu0 %v19
  %212 = vmatprep.subr.mxu0 0.0
  %213 = vmatpush2.msra.mxu0 0.0
  %214 = vmatprep.subr.mxu0 0.0
  %215 = vmatpush2.msra.mxu0 0.0
  %216 = vmatprep.subr.mxu0 0.0
  %217 = vmatpush2.msra.mxu0 0.0
  %218 = vmatprep.subr.mxu0 0.0
  %219 = vmatpush2.msra.mxu0 0.0
  %220 = vmatprep.subr.mxu0 0.0
  %221 = vmatpush2.msra.mxu0 0.0
  %222 = vmatprep.subr.mxu0 0.0
  %223 = vmatpush2.msra.mxu0 0.0
  %224 = vmatprep.subr.mxu0 0.0
  %225 = vmatpush2.msra.mxu0 0.0
  %226 = vmatprep.subr.mxu0 0.0
  %227 = vmatpush2.msra.mxu0 0.0
  %228 = vmatprep.subr.mxu0 0.0
  %229 = vmatpush2.msra.mxu0 0.0
  %230 = vmatprep.subr.mxu0 0.0
  %231 = vmatpush2.msra.mxu0 0.0
  %232 = vmatprep.subr.mxu0 0.0
  %233 = vmatpush2.msra.mxu0 0.0
  %234 = vmatprep.subr.mxu0 0.0
  %235 = vmatpush2.msra.mxu0 0.0
  %236 = vmatprep.subr.mxu0 0.0
  %237 = vmatpush2.msra.mxu0 0.0
  %238 = vmatprep.subr.mxu0 0.0
  %239 = vmatpush2.msra.mxu0 0.0
  %240 = vmatprep.subr.mxu0 0.0
  %241 = vmatpush2.msra.mxu0 0.0
  %242 = vmatprep.subr.mxu0 0.0
  %243 = vmatpush2.msra.mxu0 0.0
  %244 = vmatprep.mubr.f32.mxu0 0.0
  %245 = vmatmul.mubr.f32.gmra.mxu0 %v178
  %v246 = vpop.f32.mrf.mxu0
  %v247 = vadd.f32 %v176, %v246
  %v248 = vpop.f32.mrf.mxu0
  %249 = vdwg.mxu0
  %v250 = vtanh.pop %v247
  %v251 = vld [vmem:[#allocation2 + $0x8] sm:$0xff]
  %v253 = vsel %vm166, %v250, 0
  %255 = vmatprep.subr.mxu0 0.0
  %256 = vmatpush1.msra.mxu0 0.0
  %257 = vmatprep.subr.mxu0 0.0
  %258 = vmatpush1.msra.mxu0 0.0
  %259 = vmatprep.subr.mxu0 0.0
  %260 = vmatpush1.msra.mxu0 0.0
  %261 = vmatprep.subr.mxu0 0.0
  %262 = vmatpush1.msra.mxu0 0.0
  %263 = vmatprep.subr.mxu0 0.0
  %264 = vmatpush1.msra.mxu0 0.0
  %265 = vmatprep.subr.mxu0 0.0
  %266 = vmatpush1.msra.mxu0 0.0
  %267 = vmatprep.subr.mxu0 0.0
  %268 = vmatpush1.msra.mxu0 0.0
  %269 = vmatprep.subr.mxu0 0.0
  %270 = vmatpush1.msra.mxu0 0.0
  %271 = vmatprep.subr.mxu0 0.0
  %272 = vmatpush1.msra.mxu0 0.0
  %273 = vmatprep.subr.mxu0 0.0
  %274 = vmatpush1.msra.mxu0 0.0
  %275 = vmatprep.subr.mxu0 0.0
  %276 = vmatpush1.msra.mxu0 0.0
  %277 = vmatprep.subr.mxu0 0.0
  %278 = vmatpush1.msra.mxu0 0.0
  %279 = vmatprep.subr.mxu0 0.0
  %280 = vmatpush1.msra.mxu0 %v22
  %281 = vmatprep.subr.mxu0 0.0
  %282 = vmatpush1.msra.mxu0 %v21
  %283 = vmatprep.subr.mxu0 0.0
  %284 = vmatpush1.msra.mxu0 %v20
  %285 = vmatprep.subr.mxu0 0.0
  %286 = vmatpush1.msra.mxu0 %v19
  %287 = vmatprep.subr.mxu0 0.0
  %288 = vmatpush2.msra.mxu0 0.0
  %289 = vmatprep.subr.mxu0 0.0
  %290 = vmatpush2.msra.mxu0 0.0
  %291 = vmatprep.subr.mxu0 0.0
  %292 = vmatpush2.msra.mxu0 0.0
  %293 = vmatprep.subr.mxu0 0.0
  %294 = vmatpush2.msra.mxu0 0.0
  %295 = vmatprep.subr.mxu0 0.0
  %296 = vmatpush2.msra.mxu0 0.0
  %297 = vmatprep.subr.mxu0 0.0
  %298 = vmatpush2.msra.mxu0 0.0
  %299 = vmatprep.subr.mxu0 0.0
  %300 = vmatpush2.msra.mxu0 0.0
  %301 = vmatprep.subr.mxu0 0.0
  %302 = vmatpush2.msra.mxu0 0.0
  %303 = vmatprep.subr.mxu0 0.0
  %304 = vmatpush2.msra.mxu0 0.0
  %305 = vmatprep.subr.mxu0 0.0
  %306 = vmatpush2.msra.mxu0 0.0
  %307 = vmatprep.subr.mxu0 0.0
  %308 = vmatpush2.msra.mxu0 0.0
  %309 = vmatprep.subr.mxu0 0.0
  %310 = vmatpush2.msra.mxu0 0.0
  %311 = vmatprep.subr.mxu0 0.0
  %312 = vmatpush2.msra.mxu0 0.0
  %313 = vmatprep.subr.mxu0 0.0
  %314 = vmatpush2.msra.mxu0 0.0
  %315 = vmatprep.subr.mxu0 0.0
  %316 = vmatpush2.msra.mxu0 0.0
  %317 = vmatprep.subr.mxu0 0.0
  %318 = vmatpush2.msra.mxu0 0.0
  %319 = vmatprep.mubr.f32.mxu0 0.0
  %320 = vmatmul.mubr.f32.gmra.mxu0 %v253
  %v321 = vpop.f32.mrf.mxu0
  %v322 = vadd.f32 %v251, %v321
  %v323 = vpop.f32.mrf.mxu0
  %324 = vdwg.mxu0
  %v325 = vtanh.pop %v322
  %v326 = vld [vmem:[#allocation2 + $0x10] sm:$0xff]
  %v328 = vsel %vm166, %v325, 0
  %330 = vmatprep.subr.mxu0 0.0
  %331 = vmatpush1.msra.mxu0 0.0
  %332 = vmatprep.subr.mxu0 0.0
  %333 = vmatpush1.msra.mxu0 0.0
  %334 = vmatprep.subr.mxu0 0.0
  %335 = vmatpush1.msra.mxu0 0.0
  %336 = vmatprep.subr.mxu0 0.0
  %337 = vmatpush1.msra.mxu0 0.0
  %338 = vmatprep.subr.mxu0 0.0
  %339 = vmatpush1.msra.mxu0 0.0
  %340 = vmatprep.subr.mxu0 0.0
  %341 = vmatpush1.msra.mxu0 0.0
  %342 = vmatprep.subr.mxu0 0.0
  %343 = vmatpush1.msra.mxu0 0.0
  %344 = vmatprep.subr.mxu0 0.0
  %345 = vmatpush1.msra.mxu0 0.0
  %346 = vmatprep.subr.mxu0 0.0
  %347 = vmatpush1.msra.mxu0 0.0
  %348 = vmatprep.subr.mxu0 0.0
  %349 = vmatpush1.msra.mxu0 0.0
  %350 = vmatprep.subr.mxu0 0.0
  %351 = vmatpush1.msra.mxu0 0.0
  %352 = vmatprep.subr.mxu0 0.0
  %353 = vmatpush1.msra.mxu0 0.0
  %354 = vmatprep.subr.mxu0 0.0
  %355 = vmatpush1.msra.mxu0 %v22
  %356 = vmatprep.subr.mxu0 0.0
  %357 = vmatpush1.msra.mxu0 %v21
  %358 = vmatprep.subr.mxu0 0.0
  %359 = vmatpush1.msra.mxu0 %v20
  %360 = vmatprep.subr.mxu0 0.0
  %361 = vmatpush1.msra.mxu0 %v19
  %362 = vmatprep.subr.mxu0 0.0
  %363 = vmatpush2.msra.mxu0 0.0
  %364 = vmatprep.subr.mxu0 0.0
  %365 = vmatpush2.msra.mxu0 0.0
  %366 = vmatprep.subr.mxu0 0.0
  %367 = vmatpush2.msra.mxu0 0.0
  %368 = vmatprep.subr.mxu0 0.0
  %369 = vmatpush2.msra.mxu0 0.0
  %370 = vmatprep.subr.mxu0 0.0
  %371 = vmatpush2.msra.mxu0 0.0
  %372 = vmatprep.subr.mxu0 0.0
  %373 = vmatpush2.msra.mxu0 0.0
  %374 = vmatprep.subr.mxu0 0.0
  %375 = vmatpush2.msra.mxu0 0.0
  %376 = vmatprep.subr.mxu0 0.0
  %377 = vmatpush2.msra.mxu0 0.0
  %378 = vmatprep.subr.mxu0 0.0
  %379 = vmatpush2.msra.mxu0 0.0
  %380 = vmatprep.subr.mxu0 0.0
  %381 = vmatpush2.msra.mxu0 0.0
  %382 = vmatprep.subr.mxu0 0.0
  %383 = vmatpush2.msra.mxu0 0.0
  %384 = vmatprep.subr.mxu0 0.0
  %385 = vmatpush2.msra.mxu0 0.0
  %386 = vmatprep.subr.mxu0 0.0
  %387 = vmatpush2.msra.mxu0 0.0
  %388 = vmatprep.subr.mxu0 0.0
  %389 = vmatpush2.msra.mxu0 0.0
  %390 = vmatprep.subr.mxu0 0.0
  %391 = vmatpush2.msra.mxu0 0.0
  %392 = vmatprep.subr.mxu0 0.0
  %393 = vmatpush2.msra.mxu0 0.0
  %394 = vmatprep.mubr.f32.mxu0 0.0
  %395 = vmatmul.mubr.f32.gmra.mxu0 %v328
  %v396 = vpop.f32.mrf.mxu0
  %v397 = vadd.f32 %v326, %v396
  %v398 = vpop.f32.mrf.mxu0
  %399 = vdwg.mxu0
  %v400 = vtanh.pop %v397
  %v401 = vld [vmem:[#allocation2 + $0x18] sm:$0xff]
  %v403 = vsel %vm166, %v400, 0
  %405 = vmatprep.subr.mxu0 0.0
  %406 = vmatpush1.msra.mxu0 0.0
  %407 = vmatprep.subr.mxu0 0.0
  %408 = vmatpush1.msra.mxu0 0.0
  %409 = vmatprep.subr.mxu0 0.0
  %410 = vmatpush1.msra.mxu0 0.0
  %411 = vmatprep.subr.mxu0 0.0
  %412 = vmatpush1.msra.mxu0 0.0
  %413 = vmatprep.subr.mxu0 0.0
  %414 = vmatpush1.msra.mxu0 0.0
  %415 = vmatprep.subr.mxu0 0.0
  %416 = vmatpush1.msra.mxu0 0.0
  %417 = vmatprep.subr.mxu0 0.0
  %418 = vmatpush1.msra.mxu0 0.0
  %419 = vmatprep.subr.mxu0 0.0
  %420 = vmatpush1.msra.mxu0 0.0
  %421 = vmatprep.subr.mxu0 0.0
  %422 = vmatpush1.msra.mxu0 0.0
  %423 = vmatprep.subr.mxu0 0.0
  %424 = vmatpush1.msra.mxu0 0.0
  %425 = vmatprep.subr.mxu0 0.0
  %426 = vmatpush1.msra.mxu0 0.0
  %427 = vmatprep.subr.mxu0 0.0
  %428 = vmatpush1.msra.mxu0 0.0
  %429 = vmatprep.subr.mxu0 0.0
  %430 = vmatpush1.msra.mxu0 %v22
  %431 = vmatprep.subr.mxu0 0.0
  %432 = vmatpush1.msra.mxu0 %v21
  %433 = vmatprep.subr.mxu0 0.0
  %434 = vmatpush1.msra.mxu0 %v20
  %435 = vmatprep.subr.mxu0 0.0
  %436 = vmatpush1.msra.mxu0 %v19
  %437 = vmatprep.subr.mxu0 0.0
  %438 = vmatpush2.msra.mxu0 0.0
  %439 = vmatprep.subr.mxu0 0.0
  %440 = vmatpush2.msra.mxu0 0.0
  %441 = vmatprep.subr.mxu0 0.0
  %442 = vmatpush2.msra.mxu0 0.0
  %443 = vmatprep.subr.mxu0 0.0
  %444 = vmatpush2.msra.mxu0 0.0
  %445 = vmatprep.subr.mxu0 0.0
  %446 = vmatpush2.msra.mxu0 0.0
  %447 = vmatprep.subr.mxu0 0.0
  %448 = vmatpush2.msra.mxu0 0.0
  %449 = vmatprep.subr.mxu0 0.0
  %450 = vmatpush2.msra.mxu0 0.0
  %451 = vmatprep.subr.mxu0 0.0
  %452 = vmatpush2.msra.mxu0 0.0
  %453 = vmatprep.subr.mxu0 0.0
  %454 = vmatpush2.msra.mxu0 0.0
  %455 = vmatprep.subr.mxu0 0.0
  %456 = vmatpush2.msra.mxu0 0.0
  %457 = vmatprep.subr.mxu0 0.0
  %458 = vmatpush2.msra.mxu0 0.0
  %459 = vmatprep.subr.mxu0 0.0
  %460 = vmatpush2.msra.mxu0 0.0
  %461 = vmatprep.subr.mxu0 0.0
  %462 = vmatpush2.msra.mxu0 0.0
  %463 = vmatprep.subr.mxu0 0.0
  %464 = vmatpush2.msra.mxu0 0.0
  %465 = vmatprep.subr.mxu0 0.0
  %466 = vmatpush2.msra.mxu0 0.0
  %467 = vmatprep.subr.mxu0 0.0
  %468 = vmatpush2.msra.mxu0 0.0
  %469 = vmatprep.mubr.f32.mxu0 0.0
  %470 = vmatmul.mubr.f32.gmra.mxu0 %v403
  %v471 = vpop.f32.mrf.mxu0
  %v472 = vadd.f32 %v401, %v471
  %v473 = vpop.f32.mrf.mxu0
  %474 = vdwg.mxu0
  %v475 = vtanh.pop %v472
  %v476 = vld [vmem:[#allocation2 + $0x20] sm:$0xff]
  %v478 = vsel %vm166, %v475, 0
  %480 = vmatprep.subr.mxu0 0.0
  %481 = vmatpush1.msra.mxu0 0.0
  %482 = vmatprep.subr.mxu0 0.0
  %483 = vmatpush1.msra.mxu0 0.0
  %484 = vmatprep.subr.mxu0 0.0
  %485 = vmatpush1.msra.mxu0 0.0
  %486 = vmatprep.subr.mxu0 0.0
  %487 = vmatpush1.msra.mxu0 0.0
  %488 = vmatprep.subr.mxu0 0.0
  %489 = vmatpush1.msra.mxu0 0.0
  %490 = vmatprep.subr.mxu0 0.0
  %491 = vmatpush1.msra.mxu0 0.0
  %492 = vmatprep.subr.mxu0 0.0
  %493 = vmatpush1.msra.mxu0 0.0
  %494 = vmatprep.subr.mxu0 0.0
  %495 = vmatpush1.msra.mxu0 0.0
  %496 = vmatprep.subr.mxu0 0.0
  %497 = vmatpush1.msra.mxu0 0.0
  %498 = vmatprep.subr.mxu0 0.0
  %499 = vmatpush1.msra.mxu0 0.0
  %500 = vmatprep.subr.mxu0 0.0
  %501 = vmatpush1.msra.mxu0 0.0
  %502 = vmatprep.subr.mxu0 0.0
  %503 = vmatpush1.msra.mxu0 0.0
  %504 = vmatprep.subr.mxu0 0.0
  %505 = vmatpush1.msra.mxu0 %v22
  %506 = vmatprep.subr.mxu0 0.0
  %507 = vmatpush1.msra.mxu0 %v21
  %508 = vmatprep.subr.mxu0 0.0
  %509 = vmatpush1.msra.mxu0 %v20
  %510 = vmatprep.subr.mxu0 0.0
  %511 = vmatpush1.msra.mxu0 %v19
  %512 = vmatprep.subr.mxu0 0.0
  %513 = vmatpush2.msra.mxu0 0.0
  %514 = vmatprep.subr.mxu0 0.0
  %515 = vmatpush2.msra.mxu0 0.0
  %516 = vmatprep.subr.mxu0 0.0
  %517 = vmatpush2.msra.mxu0 0.0
  %518 = vmatprep.subr.mxu0 0.0
  %519 = vmatpush2.msra.mxu0 0.0
  %520 = vmatprep.subr.mxu0 0.0
  %521 = vmatpush2.msra.mxu0 0.0
  %522 = vmatprep.subr.mxu0 0.0
  %523 = vmatpush2.msra.mxu0 0.0
  %524 = vmatprep.subr.mxu0 0.0
  %525 = vmatpush2.msra.mxu0 0.0
  %526 = vmatprep.subr.mxu0 0.0
  %527 = vmatpush2.msra.mxu0 0.0
  %528 = vmatprep.subr.mxu0 0.0
  %529 = vmatpush2.msra.mxu0 0.0
  %530 = vmatprep.subr.mxu0 0.0
  %531 = vmatpush2.msra.mxu0 0.0
  %532 = vmatprep.subr.mxu0 0.0
  %533 = vmatpush2.msra.mxu0 0.0
  %534 = vmatprep.subr.mxu0 0.0
  %535 = vmatpush2.msra.mxu0 0.0
  %536 = vmatprep.subr.mxu0 0.0
  %537 = vmatpush2.msra.mxu0 0.0
  %538 = vmatprep.subr.mxu0 0.0
  %539 = vmatpush2.msra.mxu0 0.0
  %540 = vmatprep.subr.mxu0 0.0
  %541 = vmatpush2.msra.mxu0 0.0
  %542 = vmatprep.subr.mxu0 0.0
  %543 = vmatpush2.msra.mxu0 0.0
  %544 = vmatprep.mubr.f32.mxu0 0.0
  %545 = vmatmul.mubr.f32.gmra.mxu0 %v478
  %v546 = vpop.f32.mrf.mxu0
  %v547 = vadd.f32 %v476, %v546
  %v548 = vpop.f32.mrf.mxu0
  %549 = vdwg.mxu0
  %v550 = vtanh.pop %v547
  %v551 = vld [vmem:[#allocation2 + $0x28] sm:$0xff]
  %v553 = vsel %vm166, %v550, 0
  %555 = vmatprep.subr.mxu0 0.0
  %556 = vmatpush1.msra.mxu0 0.0
  %557 = vmatprep.subr.mxu0 0.0
  %558 = vmatpush1.msra.mxu0 0.0
  %559 = vmatprep.subr.mxu0 0.0
  %560 = vmatpush1.msra.mxu0 0.0
  %561 = vmatprep.subr.mxu0 0.0
  %562 = vmatpush1.msra.mxu0 0.0
  %563 = vmatprep.subr.mxu0 0.0
  %564 = vmatpush1.msra.mxu0 0.0
  %565 = vmatprep.subr.mxu0 0.0
  %566 = vmatpush1.msra.mxu0 0.0
  %567 = vmatprep.subr.mxu0 0.0
  %568 = vmatpush1.msra.mxu0 0.0
  %569 = vmatprep.subr.mxu0 0.0
  %570 = vmatpush1.msra.mxu0 0.0
  %571 = vmatprep.subr.mxu0 0.0
  %572 = vmatpush1.msra.mxu0 0.0
  %573 = vmatprep.subr.mxu0 0.0
  %574 = vmatpush1.msra.mxu0 0.0
  %575 = vmatprep.subr.mxu0 0.0
  %576 = vmatpush1.msra.mxu0 0.0
  %577 = vmatprep.subr.mxu0 0.0
  %578 = vmatpush1.msra.mxu0 0.0
  %579 = vmatprep.subr.mxu0 0.0
  %580 = vmatpush1.msra.mxu0 %v22
  %581 = vmatprep.subr.mxu0 0.0
  %582 = vmatpush1.msra.mxu0 %v21
  %583 = vmatprep.subr.mxu0 0.0
  %584 = vmatpush1.msra.mxu0 %v20
  %585 = vmatprep.subr.mxu0 0.0
  %586 = vmatpush1.msra.mxu0 %v19
  %587 = vmatprep.subr.mxu0 0.0
  %588 = vmatpush2.msra.mxu0 0.0
  %589 = vmatprep.subr.mxu0 0.0
  %590 = vmatpush2.msra.mxu0 0.0
  %591 = vmatprep.subr.mxu0 0.0
  %592 = vmatpush2.msra.mxu0 0.0
  %593 = vmatprep.subr.mxu0 0.0
  %594 = vmatpush2.msra.mxu0 0.0
  %595 = vmatprep.subr.mxu0 0.0
  %596 = vmatpush2.msra.mxu0 0.0
  %597 = vmatprep.subr.mxu0 0.0
  %598 = vmatpush2.msra.mxu0 0.0
  %599 = vmatprep.subr.mxu0 0.0
  %600 = vmatpush2.msra.mxu0 0.0
  %601 = vmatprep.subr.mxu0 0.0
  %602 = vmatpush2.msra.mxu0 0.0
  %603 = vmatprep.subr.mxu0 0.0
  %604 = vmatpush2.msra.mxu0 0.0
  %605 = vmatprep.subr.mxu0 0.0
  %606 = vmatpush2.msra.mxu0 0.0
  %607 = vmatprep.subr.mxu0 0.0
  %608 = vmatpush2.msra.mxu0 0.0
  %609 = vmatprep.subr.mxu0 0.0
  %610 = vmatpush2.msra.mxu0 0.0
  %611 = vmatprep.subr.mxu0 0.0
  %612 = vmatpush2.msra.mxu0 0.0
  %613 = vmatprep.subr.mxu0 0.0
  %614 = vmatpush2.msra.mxu0 0.0
  %615 = vmatprep.subr.mxu0 0.0
  %616 = vmatpush2.msra.mxu0 0.0
  %617 = vmatprep.subr.mxu0 0.0
  %618 = vmatpush2.msra.mxu0 0.0
  %619 = vmatprep.mubr.f32.mxu0 0.0
  %620 = vmatmul.mubr.f32.gmra.mxu0 %v553
  %v621 = vpop.f32.mrf.mxu0
  %v622 = vadd.f32 %v551, %v621
  %v623 = vpop.f32.mrf.mxu0
  %624 = vdwg.mxu0
  %v625 = vtanh.pop %v622
  %v626 = vld [vmem:[#allocation2 + $0x30] sm:$0xff]
  %v628 = vsel %vm166, %v625, 0
  %630 = vmatprep.subr.mxu0 0.0
  %631 = vmatpush1.msra.mxu0 0.0
  %632 = vmatprep.subr.mxu0 0.0
  %633 = vmatpush1.msra.mxu0 0.0
  %634 = vmatprep.subr.mxu0 0.0
  %635 = vmatpush1.msra.mxu0 0.0
  %636 = vmatprep.subr.mxu0 0.0
  %637 = vmatpush1.msra.mxu0 0.0
  %638 = vmatprep.subr.mxu0 0.0
  %639 = vmatpush1.msra.mxu0 0.0
  %640 = vmatprep.subr.mxu0 0.0
  %641 = vmatpush1.msra.mxu0 0.0
  %642 = vmatprep.subr.mxu0 0.0
  %643 = vmatpush1.msra.mxu0 0.0
  %644 = vmatprep.subr.mxu0 0.0
  %645 = vmatpush1.msra.mxu0 0.0
  %646 = vmatprep.subr.mxu0 0.0
  %647 = vmatpush1.msra.mxu0 0.0
  %648 = vmatprep.subr.mxu0 0.0
  %649 = vmatpush1.msra.mxu0 0.0
  %650 = vmatprep.subr.mxu0 0.0
  %651 = vmatpush1.msra.mxu0 0.0
  %652 = vmatprep.subr.mxu0 0.0
  %653 = vmatpush1.msra.mxu0 0.0
  %654 = vmatprep.subr.mxu0 0.0
  %655 = vmatpush1.msra.mxu0 %v22
  %656 = vmatprep.subr.mxu0 0.0
  %657 = vmatpush1.msra.mxu0 %v21
  %658 = vmatprep.subr.mxu0 0.0
  %659 = vmatpush1.msra.mxu0 %v20
  %660 = vmatprep.subr.mxu0 0.0
  %661 = vmatpush1.msra.mxu0 %v19
  %662 = vmatprep.subr.mxu0 0.0
  %663 = vmatpush2.msra.mxu0 0.0
  %664 = vmatprep.subr.mxu0 0.0
  %665 = vmatpush2.msra.mxu0 0.0
  %666 = vmatprep.subr.mxu0 0.0
  %667 = vmatpush2.msra.mxu0 0.0
  %668 = vmatprep.subr.mxu0 0.0
  %669 = vmatpush2.msra.mxu0 0.0
  %670 = vmatprep.subr.mxu0 0.0
  %671 = vmatpush2.msra.mxu0 0.0
  %672 = vmatprep.subr.mxu0 0.0
  %673 = vmatpush2.msra.mxu0 0.0
  %674 = vmatprep.subr.mxu0 0.0
  %675 = vmatpush2.msra.mxu0 0.0
  %676 = vmatprep.subr.mxu0 0.0
  %677 = vmatpush2.msra.mxu0 0.0
  %678 = vmatprep.subr.mxu0 0.0
  %679 = vmatpush2.msra.mxu0 0.0
  %680 = vmatprep.subr.mxu0 0.0
  %681 = vmatpush2.msra.mxu0 0.0
  %682 = vmatprep.subr.mxu0 0.0
  %683 = vmatpush2.msra.mxu0 0.0
  %684 = vmatprep.subr.mxu0 0.0
  %685 = vmatpush2.msra.mxu0 0.0
  %686 = vmatprep.subr.mxu0 0.0
  %687 = vmatpush2.msra.mxu0 0.0
  %688 = vmatprep.subr.mxu0 0.0
  %689 = vmatpush2.msra.mxu0 0.0
  %690 = vmatprep.subr.mxu0 0.0
  %691 = vmatpush2.msra.mxu0 0.0
  %692 = vmatprep.subr.mxu0 0.0
  %693 = vmatpush2.msra.mxu0 0.0
  %694 = vmatprep.mubr.f32.mxu0 0.0
  %695 = vmatmul.mubr.f32.gmra.mxu0 %v628
  %v696 = vpop.f32.mrf.mxu0
  %v697 = vadd.f32 %v626, %v696
  %v698 = vpop.f32.mrf.mxu0
  %699 = vdwg.mxu0
  %v700 = vtanh.pop %v697
  %v701 = vld [vmem:[#allocation2 + $0x38] sm:$0xff]
  %v703 = vsel %vm166, %v700, 0
  %705 = vmatprep.subr.mxu0 0.0
  %706 = vmatpush1.msra.mxu0 0.0
  %707 = vmatprep.subr.mxu0 0.0
  %708 = vmatpush1.msra.mxu0 0.0
  %709 = vmatprep.subr.mxu0 0.0
  %710 = vmatpush1.msra.mxu0 0.0
  %711 = vmatprep.subr.mxu0 0.0
  %712 = vmatpush1.msra.mxu0 0.0
  %713 = vmatprep.subr.mxu0 0.0
  %714 = vmatpush1.msra.mxu0 0.0
  %715 = vmatprep.subr.mxu0 0.0
  %716 = vmatpush1.msra.mxu0 0.0
  %717 = vmatprep.subr.mxu0 0.0
  %718 = vmatpush1.msra.mxu0 0.0
  %719 = vmatprep.subr.mxu0 0.0
  %720 = vmatpush1.msra.mxu0 0.0
  %721 = vmatprep.subr.mxu0 0.0
  %722 = vmatpush1.msra.mxu0 0.0
  %723 = vmatprep.subr.mxu0 0.0
  %724 = vmatpush1.msra.mxu0 0.0
  %725 = vmatprep.subr.mxu0 0.0
  %726 = vmatpush1.msra.mxu0 0.0
  %727 = vmatprep.subr.mxu0 0.0
  %728 = vmatpush1.msra.mxu0 0.0
  %729 = vmatprep.subr.mxu0 0.0
  %730 = vmatpush1.msra.mxu0 %v22
  %731 = vmatprep.subr.mxu0 0.0
  %732 = vmatpush1.msra.mxu0 %v21
  %733 = vmatprep.subr.mxu0 0.0
  %734 = vmatpush1.msra.mxu0 %v20
  %735 = vmatprep.subr.mxu0 0.0
  %736 = vmatpush1.msra.mxu0 %v19
  %737 = vmatprep.subr.mxu0 0.0
  %738 = vmatpush2.msra.mxu0 0.0
  %739 = vmatprep.subr.mxu0 0.0
  %740 = vmatpush2.msra.mxu0 0.0
  %741 = vmatprep.subr.mxu0 0.0
  %742 = vmatpush2.msra.mxu0 0.0
  %743 = vmatprep.subr.mxu0 0.0
  %744 = vmatpush2.msra.mxu0 0.0
  %745 = vmatprep.subr.mxu0 0.0
  %746 = vmatpush2.msra.mxu0 0.0
  %747 = vmatprep.subr.mxu0 0.0
  %748 = vmatpush2.msra.mxu0 0.0
  %749 = vmatprep.subr.mxu0 0.0
  %750 = vmatpush2.msra.mxu0 0.0
  %751 = vmatprep.subr.mxu0 0.0
  %752 = vmatpush2.msra.mxu0 0.0
  %753 = vmatprep.subr.mxu0 0.0
  %754 = vmatpush2.msra.mxu0 0.0
  %755 = vmatprep.subr.mxu0 0.0
  %756 = vmatpush2.msra.mxu0 0.0
  %757 = vmatprep.subr.mxu0 0.0
  %758 = vmatpush2.msra.mxu0 0.0
  %759 = vmatprep.subr.mxu0 0.0
  %760 = vmatpush2.msra.mxu0 0.0
  %761 = vmatprep.subr.mxu0 0.0
  %762 = vmatpush2.msra.mxu0 0.0
  %763 = vmatprep.subr.mxu0 0.0
  %764 = vmatpush2.msra.mxu0 0.0
  %765 = vmatprep.subr.mxu0 0.0
  %766 = vmatpush2.msra.mxu0 0.0
  %767 = vmatprep.subr.mxu0 0.0
  %768 = vmatpush2.msra.mxu0 0.0
  %769 = vmatprep.mubr.f32.mxu0 0.0
  %770 = vmatmul.mubr.f32.gmra.mxu0 %v703
  %v771 = vpop.f32.mrf.mxu0
  %v772 = vadd.f32 %v701, %v771
  %v773 = vpop.f32.mrf.mxu0
  %774 = vdwg.mxu0
  %v775 = vtanh.pop %v772
  %v776 = vld [vmem:[%s3] sm:$0xff]
  %v777 = vld [vmem:[%s3 + $0x8] sm:$0xff]
  %v778 = vld [vmem:[%s3 + $0x10] sm:$0xff]
  %v779 = vld [vmem:[%s3 + $0x18] sm:$0xff]
  %v780 = vld [vmem:[%s3 + $0x20] sm:$0x1]
  %v781 = vlaneseq
  %v782 = vshrl.u32 %v781, 7
  %v783 = vsub.s32 0, %v782
  %v784 = vrot.slane %v780, %v783
  %v786 = vsel %vm166, %v775, 0
  %788 = vmatprep.subr.mxu0 0.0
  %789 = vmatpush1.msra.mxu0 0.0
  %790 = vmatprep.subr.mxu0 0.0
  %791 = vmatpush1.msra.mxu0 0.0
  %792 = vmatprep.subr.mxu0 0.0
  %793 = vmatpush1.msra.mxu0 0.0
  %794 = vmatprep.subr.mxu0 0.0
  %795 = vmatpush1.msra.mxu0 0.0
  %796 = vmatprep.subr.mxu0 0.0
  %797 = vmatpush1.msra.mxu0 0.0
  %798 = vmatprep.subr.mxu0 0.0
  %799 = vmatpush1.msra.mxu0 0.0
  %800 = vmatprep.subr.mxu0 0.0
  %801 = vmatpush1.msra.mxu0 0.0
  %802 = vmatprep.subr.mxu0 0.0
  %803 = vmatpush1.msra.mxu0 0.0
  %804 = vmatprep.subr.mxu0 0.0
  %805 = vmatpush1.msra.mxu0 0.0
  %806 = vmatprep.subr.mxu0 0.0
  %807 = vmatpush1.msra.mxu0 0.0
  %808 = vmatprep.subr.mxu0 0.0
  %809 = vmatpush1.msra.mxu0 0.0
  %810 = vmatprep.subr.mxu0 0.0
  %811 = vmatpush1.msra.mxu0 0.0
  %812 = vmatprep.subr.mxu0 0.0
  %813 = vmatpush1.msra.mxu0 %v779
  %814 = vmatprep.subr.mxu0 0.0
  %815 = vmatpush1.msra.mxu0 %v778
  %816 = vmatprep.subr.mxu0 0.0
  %817 = vmatpush1.msra.mxu0 %v777
  %818 = vmatprep.subr.mxu0 0.0
  %819 = vmatpush1.msra.mxu0 %v776
  %820 = vmatprep.subr.mxu0 0.0
  %821 = vmatpush2.msra.mxu0 0.0
  %822 = vmatprep.subr.mxu0 0.0
  %823 = vmatpush2.msra.mxu0 0.0
  %824 = vmatprep.subr.mxu0 0.0
  %825 = vmatpush2.msra.mxu0 0.0
  %826 = vmatprep.subr.mxu0 0.0
  %827 = vmatpush2.msra.mxu0 0.0
  %828 = vmatprep.subr.mxu0 0.0
  %829 = vmatpush2.msra.mxu0 0.0
  %830 = vmatprep.subr.mxu0 0.0
  %831 = vmatpush2.msra.mxu0 0.0
  %832 = vmatprep.subr.mxu0 0.0
  %833 = vmatpush2.msra.mxu0 0.0
  %834 = vmatprep.subr.mxu0 0.0
  %835 = vmatpush2.msra.mxu0 0.0
  %836 = vmatprep.subr.mxu0 0.0
  %837 = vmatpush2.msra.mxu0 0.0
  %838 = vmatprep.subr.mxu0 0.0
  %839 = vmatpush2.msra.mxu0 0.0
  %840 = vmatprep.subr.mxu0 0.0
  %841 = vmatpush2.msra.mxu0 0.0
  %842 = vmatprep.subr.mxu0 0.0
  %843 = vmatpush2.msra.mxu0 0.0
  %844 = vmatprep.subr.mxu0 0.0
  %845 = vmatpush2.msra.mxu0 0.0
  %846 = vmatprep.subr.mxu0 0.0
  %847 = vmatpush2.msra.mxu0 0.0
  %848 = vmatprep.subr.mxu0 0.0
  %849 = vmatpush2.msra.mxu0 0.0
  %850 = vmatprep.subr.mxu0 0.0
  %851 = vmatpush2.msra.mxu0 0.0
  %852 = vmatprep.mubr.f32.mxu0 0.0
  %853 = vmatmul.mubr.f32.gmra.mxu0 %v786
  %v854 = vpop.f32.mrf.mxu0
  %v855 = vadd.f32 %v784, %v854
  %v856 = vpop.f32.mrf.mxu0
  %857 = vdwg.mxu0
  %858 = vst [vmem:[%s4] sm:$0xff] %v855
  // Predicated region
  $region18: #{rnn_model_forward.1} parent=0 // pred_check
    _
  $region19: #{rnn_model_forward.1} parent=0 // pred_check_branch
    %860 = sbr.rel (0) target = $region21
  $region20: #{rnn_model_forward.1} parent=0 // pred_region
    _
  $region21: #{rnn_model_forward.1} parent=0 // pred_fallthru
    _
  // Predicated region
  $region22: #{rnn_model_forward.1} parent=0 // pred_check
    _
  $region23: #{rnn_model_forward.1} parent=0 // pred_check_branch
    %862 = sbr.rel (0) target = $region25
  $region24: #{rnn_model_forward.1} parent=0 // pred_region
    _
  $region25: #{rnn_model_forward.1} parent=0 // pred_fallthru
    _

</llo_original>
